<compile_context>
chip_gen: v7x
topology: tpu7x:2x2x1
jax: 0.10.0
libtpu: 0.0.40
codegen_flags: <defaults>
</compile_context>

<pallas_src>
import jax
import jax.numpy as jnp
from jax.experimental import pallas as pl
from jax.experimental.pallas import tpu as pltpu


def _vrd_kernel(mask_ref, x_ref, o_ref):
    """One (seq-tile, hidden-tile) block: multiply by the resident locked mask."""
    o_ref[...] = x_ref[...] * mask_ref[...]   # (tt, th) * (1, th) broadcast


def _choose_tiles(T, BH, itemsize, per_buffer_bytes):
    """Pick (tt, th): seq-tile rows and flattened-hidden tile width."""
    row_bytes = BH * itemsize
    if row_bytes <= per_buffer_bytes:
        th = BH                                   # whole row fits in one buffer
    else:
        # Split the flattened hidden axis in lane multiples so ~8 rows fit.
        th = (per_buffer_bytes // (8 * itemsize)) // 128 * 128
        th = max(128, min(th, BH))

    tile_row_bytes = th * itemsize
    tt = max(1, per_buffer_bytes // tile_row_bytes)
    tt = min(tt, T)
    # Keep at least ~4 grid steps along T (when T allows) so double-buffering
    # can overlap input DMA, compute, and output writeback.
    if T >= 32:
        tt = min(tt, pl.cdiv(T, 4))

    if tt < T:
        # (8,128) constraint: second-to-last block dim must be a multiple of 8
        # (or equal to T).
        tt = max(8, (tt // 8) * 8)
        if tt >= T:
            tt = T
        else:
            # Prefer a tt that divides T to avoid a masked partial last tile
            # (bounded search).
            for cand in range(tt, max(7, tt - 8 * 64), -8):
                if cand >= 8 and T % cand == 0:
                    tt = cand
                    break
    return tt, th


def variational_recurrent_dropout(x, dropout, key=None, mean_field_inference=False):
    """JAX wrapper matching VariationalRecurrentDropout.forward.

    x: (T, B, H) array. dropout: static python float in [0, 1).
    mean_field_inference: static python bool. key: jax PRNG key.
    """
    # NOTE: these branches are Python-level; dropout / mean_field_inference
    # must be static values (not traced) — same as the PyTorch module's flag.
    if mean_field_inference or dropout == 0.0:
        return x

    if key is None:
        # WARNING: repeated calls without a key reuse the identical mask.
        key = jax.random.PRNGKey(0)

    keep_prob = 1.0 - float(dropout)
    T, B, H = x.shape
    BH = B * H
    itemsize = x.dtype.itemsize

    # ---- Locked mask: one (1, B, H)-equivalent Bernoulli sample, precomputed
    # in x's dtype so the kernel body is a single multiply. ----
    bits = jax.random.bits(key, (1, BH), dtype=jnp.uint32)
    # Integer threshold: P(bits < thresh) == keep_prob to within 2^-32
    # (floor bias <= 2^-32, negligible).
    thresh = jnp.uint32(min(int(keep_prob * 2.0 ** 32), 2 ** 32 - 1))
    scale = jnp.asarray(1.0 / keep_prob, dtype=x.dtype)
    mask = jnp.where(bits < thresh, scale, jnp.zeros((), x.dtype))   # (1, BH)

    # ---- Tiling: lane-dense (T, B*H) layout, ~8 MiB per pipeline buffer,
    # explicit 48 MiB VMEM budget (safe on v5e/v6e/v7x). ----
    per_buffer_bytes = 8 * 1024 * 1024
    vmem_limit_bytes = 48 * 1024 * 1024
    tt, th = _choose_tiles(T, BH, itemsize, per_buffer_bytes)
    grid = (pl.cdiv(T, tt), pl.cdiv(BH, th))

    x2 = x.reshape(T, BH)

    out2 = pl.pallas_call(
        _vrd_kernel,
        out_shape=jax.ShapeDtypeStruct((T, BH), x.dtype),
        grid=grid,
        in_specs=[
            # Locked mask: resident along T, tiled only along the hidden axis.
            pl.BlockSpec((1, th), lambda t, h: (0, h)),
            # x: streamed (seq-tile, hidden-tile) blocks.
            pl.BlockSpec((tt, th), lambda t, h: (t, h)),
        ],
        out_specs=pl.BlockSpec((tt, th), lambda t, h: (t, h)),
        compiler_params=pltpu.CompilerParams(
            dimension_semantics=("parallel", "parallel"),
            vmem_limit_bytes=vmem_limit_bytes,
        ),
        cost_estimate=pl.CostEstimate(
            flops=T * BH,
            transcendentals=0,
            bytes_accessed=2 * T * BH * itemsize + BH * itemsize,
        ),
    )(mask, x2)

    return out2.reshape(T, B, H)


if __name__ == "__main__":
    # Small shapes consistent with the module: (seq=8, batch=2, hidden=128).
    T, B, H = 8, 2, 128
    dropout = 0.3

    key = jax.random.PRNGKey(0)
    x_key, mask_key = jax.random.split(key)
    x = jax.random.normal(x_key, (T, B, H), dtype=jnp.float32)

    # Dropout path (training-style sampling).
    y = variational_recurrent_dropout(x, dropout, key=mask_key,
                                      mean_field_inference=False)
    y = jax.block_until_ready(y)

    # Mean-field inference path: identity.
    y_mf = variational_recurrent_dropout(x, dropout, mean_field_inference=True)
    y_mf = jax.block_until_ready(y_mf)

    # Sanity checks on semantics (not on RNG values):
    assert y.shape == x.shape and y.dtype == x.dtype
    assert bool(jnp.all(y_mf == x))
    # Each output element is either 0 or x / (1 - dropout).
    keep_prob = 1.0 - dropout
    is_zero = jnp.isclose(y, 0.0, atol=1e-6)
    is_scaled = jnp.isclose(y, x / keep_prob, rtol=1e-5, atol=1e-6)
    assert bool(jnp.all(is_zero | is_scaled))
    # Mask is locked across the time axis: zero-pattern identical for all t.
    zero_pattern = is_zero & ~jnp.isclose(x, 0.0, atol=1e-6)
    assert bool(jnp.all(zero_pattern == zero_pattern[0:1]))

    print("KERNEL_OK")
</pallas_src>

<mosaic_0001>
module attributes {stable_mosaic.version = 11 : i64} {
  func.func @_vrd_kernel(%arg0: i32, %arg1: i32, %arg2: memref<1x256xf32, #tpu.memory_space<vmem>>, %arg3: memref<8x256xf32, #tpu.memory_space<vmem>>, %arg4: memref<8x256xf32, #tpu.memory_space<vmem>>) attributes {dimension_semantics = [#tpu.dimension_semantics<parallel>, #tpu.dimension_semantics<parallel>], iteration_bounds = array<i64: 1, 1>, scalar_prefetch = 0 : i64, scratch_operands = 0 : i64, tpu.core_type = #tpu.core_type<tc>, window_params = [{transform_indices = @transform_0, window_bounds = array<i64: 1, 256>}, {transform_indices = @transform_1, window_bounds = array<i64: 8, 256>}, {transform_indices = @transform_2, window_bounds = array<i64: 8, 256>}]} {
    %c0 = arith.constant 0 : index
    %c0_0 = arith.constant 0 : index
    %0 = vector.load %arg3[%c0, %c0_0] : memref<8x256xf32, #tpu.memory_space<vmem>>, vector<8x256xf32>
    %c0_1 = arith.constant 0 : index
    %c0_2 = arith.constant 0 : index
    %1 = vector.load %arg2[%c0_1, %c0_2] : memref<1x256xf32, #tpu.memory_space<vmem>>, vector<1x256xf32>
    %2 = vector.broadcast %1 : vector<1x256xf32> to vector<8x256xf32>
    %3 = arith.mulf %0, %2 : vector<8x256xf32>
    %c0_3 = arith.constant 0 : index
    %c0_4 = arith.constant 0 : index
    %4 = vector.load %arg4[%c0_3, %c0_4] : memref<8x256xf32, #tpu.memory_space<vmem>>, vector<8x256xf32>
    tpu.vector_store %arg4[%c0_3, %c0_4], %3 {strides = array<i32>} : memref<8x256xf32, #tpu.memory_space<vmem>>, vector<8x256xf32>,
    return
  }
  func.func @transform_0(%arg0: i32, %arg1: i32) -> (i32, i32) {
    %c0_i32 = arith.constant 0 : i32
    %c0_i32_0 = arith.constant 0 : i32
    return %c0_i32, %arg1 : i32, i32
  }
  func.func @transform_1(%arg0: i32, %arg1: i32) -> (i32, i32) {
    %c0_i32 = arith.constant 0 : i32
    return %arg0, %arg1 : i32, i32
  }
  func.func @transform_2(%arg0: i32, %arg1: i32) -> (i32, i32) {
    %c0_i32 = arith.constant 0 : i32
    return %arg0, %arg1 : i32, i32
  }
}

</mosaic_0001>

<llo_original>
// kernel: tpu_custom_call.1
$region0: #{tpu_custom_call.1}
  #allocation0 [shape = 'u32[]', space=smem, size = 0x4, offset = 0x4, fixed_abs, tag = 'smem constant byte address 0x4 - core index']
  #allocation1 [shape = 'u32[144,128]{1,0:T(1,128)}', space=vmem, size = 0x12000, scoped, tag = 'internal scratch']
  %s0 = inlined_call_operand.hbm [shape: f32[1,256], index: 0, kind: input, shape index: {}]
  %s1 = inlined_call_operand.hbm [shape: f32[8,256], index: 1, kind: input, shape index: {}]
  %s2 = inlined_call_operand.hbm [shape: f32[8,256], index: 2, kind: output, shape index: {}]
  %s3 = sld [smem:[#allocation0]]
  $region26: #{tpu_custom_call.1} parent=0
    _
  %s5 = ssub.s32 1, %s3
  %s6 = scalar_select 0, %s5, %s3
  $region1: #{tpu_custom_call.1} parent=0
    #allocation2 [shape = 'u8[1024]{0}', space=vmem, size = 0x400, scoped, tag = 'input window, operand 0, single buffered']
    #allocation3 [shape = 's32[1]{0}', space=sflag, size = 0x4, scoped, tag = 'scoped memory for tpu_custom_call.1']
    #allocation4 [shape = 's32[1]{0}', space=sflag, size = 0x4, scoped, tag = 'scoped memory for tpu_custom_call.1']
    #allocation5 [shape = 'u8[8192]{0}', space=vmem, size = 0x2000, scoped, tag = 'input window, operand 1, single buffered']
    #allocation6 [shape = 's32[1]{0}', space=sflag, size = 0x4, scoped, tag = 'scoped memory for tpu_custom_call.1']
    #allocation7 [shape = 'u8[8192]{0}', space=vmem, size = 0x2000, scoped, tag = 'output window, operand 0, single buffered']
    %7 = vsyncpa [#allocation3], 0
    %8 = vsyncpa [#allocation6], 0
    %9 = vsyncpa [#allocation4], 0
    // Predicated region
    $region2: #{tpu_custom_call.1} parent=1 // pred_check
      _
    $region3: #{tpu_custom_call.1} parent=1 // pred_check_branch
      %11 = sbr.rel (0) target = $region5
    $region4: #{tpu_custom_call.1} parent=1 // pred_region
      %s13 = ssub.s32 32, 32
      %14 = vsyncadd [#allocation3], %s13
      %s16 = sshll.u32 [#allocation2], 4
      %s17 = int_to_ptr.vmem [resolvable:$true] %s16
      %19 = dma.hbm_to_vmem [thread:$0]  %s0, 32, %s17, [#allocation3]
    $region5: #{tpu_custom_call.1} parent=1 // pred_fallthru
      _
    // Predicated region
    $region6: #{tpu_custom_call.1} parent=1 // pred_check
      _
    $region7: #{tpu_custom_call.1} parent=1 // pred_check_branch
      %21 = sbr.rel (0) target = $region9
    $region8: #{tpu_custom_call.1} parent=1 // pred_region
      %s23 = ssub.s32 256, 256
      %24 = vsyncadd [#allocation6], %s23
      %s26 = sshll.u32 [#allocation5], 4
      %s27 = int_to_ptr.vmem [resolvable:$true] %s26
      %29 = dma.hbm_to_vmem [thread:$0]  %s1, 256, %s27, [#allocation6]
    $region9: #{tpu_custom_call.1} parent=1 // pred_fallthru
      _
    // Predicated region
    $region10: #{tpu_custom_call.1} parent=1 // pred_check
      _
    $region11: #{tpu_custom_call.1} parent=1 // pred_check_branch
      %31 = sbr.rel (0) target = $region13
    $region12: #{tpu_custom_call.1} parent=1 // pred_region
      %32 = dma.done [#allocation3], 32
    $region13: #{tpu_custom_call.1} parent=1 // pred_fallthru
      _
    // Predicated region
    $region14: #{tpu_custom_call.1} parent=1 // pred_check
      _
    $region15: #{tpu_custom_call.1} parent=1 // pred_check_branch
      %34 = sbr.rel (0) target = $region17
    $region16: #{tpu_custom_call.1} parent=1 // pred_region
      %35 = dma.done [#allocation6], 256
    $region17: #{tpu_custom_call.1} parent=1 // pred_fallthru
      _
    %v36 = vld [vmem:[#allocation5] sm:$0xff]
    %v37 = vld [vmem:[#allocation5 + $0x8] sm:$0xff]
    %v38 = vld [vmem:[#allocation2] sm:$0x3]
    %v40 = vlaneseq
    %v41 = vshrl.u32 %v40, 7
    %v42 = vsub.s32 0, %v41
    %v43 = vrot.slane %v38, %v42
    %v44 = vlaneseq
    %v45 = vshrl.u32 %v44, 7
    %v46 = vsub.s32 1, %v45
    %v47 = vrot.slane %v38, %v46
    %v50 = vmul.f32 %v36, %v43
    %v51 = vmul.f32 %v37, %v47
    %52 = vst [vmem:[#allocation7] sm:$0xff] %v50
    %53 = vst [vmem:[#allocation7 + $0x8] sm:$0xff] %v51
    // Predicated region
    $region18: #{tpu_custom_call.1} parent=1 // pred_check
      _
    $region19: #{tpu_custom_call.1} parent=1 // pred_check_branch
      %55 = sbr.rel (0) target = $region21
    $region20: #{tpu_custom_call.1} parent=1 // pred_region
      %s57 = ssub.s32 256, 256
      %58 = vsyncadd [#allocation4], %s57
      %s60 = sshll.u32 [#allocation7], 4
      %s61 = int_to_ptr.vmem [resolvable:$true] %s60
      %63 = dma.vmem_to_hbm [thread:$0]  %s61, 256, %s2, [#allocation4]
    $region21: #{tpu_custom_call.1} parent=1 // pred_fallthru
      _
    // Predicated region
    $region22: #{tpu_custom_call.1} parent=1 // pred_check
      _
    $region23: #{tpu_custom_call.1} parent=1 // pred_check_branch
      %65 = sbr.rel (0) target = $region25
    $region24: #{tpu_custom_call.1} parent=1 // pred_region
      %66 = dma.done [#allocation4], 256
    $region25: #{tpu_custom_call.1} parent=1 // pred_fallthru
      _
    %67 = vsyncpa [#allocation3], 1
    %68 = vsyncpa [#allocation6], 1
    %69 = vsyncpa [#allocation4], 1

</llo_original>
